<compile_context>
chip_gen: v7x
topology: tpu7x:2x2x1
jax: 0.10.0
libtpu: 0.0.40
codegen_flags: <defaults>
</compile_context>

<pallas_src>
import functools

import jax
import jax.numpy as jnp
from jax.experimental import pallas as pl
from jax.experimental.pallas import tpu as pltpu


def mlp_kernel(x_ref, w1_ref, b1_ref, w2_ref, b2_ref, o_ref):
    # x_ref : (1, TN)    batch on lanes
    # w1_ref: (H, 1)     first-layer weight column (H = 20)
    # b1_ref: (H, 1)
    # w2_ref: (H, O)     second-layer weight (O = 2)
    # b2_ref: (O, 1)
    # o_ref : (O, TN)
    x = x_ref[...]                      # (1, TN)
    w1 = w1_ref[...]                    # (H, 1)
    b1 = b1_ref[...]                    # (H, 1)

    # Layer 1: outer-product-as-broadcast on the VPU, tanh on the EUP.
    h = jnp.tanh(w1 * x + b1)           # (H, TN)

    w2 = w2_ref[...]                    # (H, O)
    n_out = o_ref.shape[0]

    # Layer 2: per-output-column VPU multiply + XLU sublane reduction.
    # O = 2, so this unrolls to two multiply/reduce pairs (no MXU needed).
    cols = [
        jnp.sum(h * w2[:, k:k + 1], axis=0, keepdims=True)   # (1, TN)
        for k in range(n_out)
    ]
    y = jnp.concatenate(cols, axis=0) + b2_ref[...]           # (O, TN)
    o_ref[...] = y.astype(o_ref.dtype)


@functools.partial(jax.jit, static_argnames=("tn",))
def mlp_forward(x, w1, b1, w2, b2, *, tn=16384):
    """x: (N, 1) f32; w1: (1, H); b1: (H,); w2: (H, O); b2: (O,) -> (N, O)."""
    assert tn % 128 == 0, "tile width must be a multiple of 128 lanes"
    N = x.shape[0]
    H = w1.shape[1]
    O = w2.shape[1]

    # --- wrapper-side layout plumbing (lane-dense batch) -------------------
    n_pad = pl.cdiv(N, tn) * tn
    x_t = x.reshape(1, N).astype(jnp.float32)
    if n_pad != N:
        x_t = jnp.pad(x_t, ((0, 0), (0, n_pad - N)))
    w1_t = jnp.transpose(w1).reshape(H, 1).astype(jnp.float32)   # (H, 1)
    b1_c = b1.reshape(H, 1).astype(jnp.float32)                  # (H, 1)
    w2_c = w2.astype(jnp.float32)                                # (H, O)
    b2_c = b2.reshape(O, 1).astype(jnp.float32)                  # (O, 1)

    grid = (n_pad // tn,)

    # Advisory cost hint: ~122 flops + 20 tanh + 12 bytes of HBM per row.
    cost = pl.CostEstimate(
        flops=122 * n_pad,
        transcendentals=H * n_pad,
        bytes_accessed=12 * n_pad,
    )

    y_t = pl.pallas_call(
        mlp_kernel,
        out_shape=jax.ShapeDtypeStruct((O, n_pad), jnp.float32),
        grid_spec=pltpu.PrefetchScalarGridSpec(
            num_scalar_prefetch=0,
            grid=grid,
            in_specs=[
                pl.BlockSpec((1, tn), lambda i: (0, i)),   # x tile (lane-dense)
                pl.BlockSpec((H, 1), lambda i: (0, 0)),    # W1 (VMEM-resident)
                pl.BlockSpec((H, 1), lambda i: (0, 0)),    # b1 (VMEM-resident)
                pl.BlockSpec((H, O), lambda i: (0, 0)),    # W2 (VMEM-resident)
                pl.BlockSpec((O, 1), lambda i: (0, 0)),    # b2 (VMEM-resident)
            ],
            out_specs=pl.BlockSpec((O, tn), lambda i: (0, i)),
        ),
        compiler_params=pltpu.CompilerParams(
            dimension_semantics=("parallel",),
        ),
        cost_estimate=cost,
    )(x_t, w1_t, b1_c, w2_c, b2_c)

    # Back to the PyTorch-facing (N, O) layout.
    return jnp.transpose(y_t[:, :N])


def init_params(key):
    """Deterministic init mimicking torch.nn.Linear default U[-1/sqrt(fan_in), 1/sqrt(fan_in)]."""
    k1, k2, k3, k4 = jax.random.split(key, 4)
    in1, out1 = 1, 20
    in2, out2 = 20, 2
    bound1 = 1.0 / jnp.sqrt(in1)
    bound2 = 1.0 / jnp.sqrt(in2)
    # stored as (in_features, out_features) so reference is y = x @ W + b
    w1 = jax.random.uniform(k1, (in1, out1), jnp.float32, -bound1, bound1)
    b1 = jax.random.uniform(k2, (out1,), jnp.float32, -bound1, bound1)
    w2 = jax.random.uniform(k3, (in2, out2), jnp.float32, -bound2, bound2)
    b2 = jax.random.uniform(k4, (out2,), jnp.float32, -bound2, bound2)
    return w1, b1, w2, b2


def mlp_reference(x, w1, b1, w2, b2):
    h = jnp.tanh(x @ w1 + b1)
    return h @ w2 + b2


if __name__ == "__main__":
    key = jax.random.PRNGKey(0)
    k_x, k_p = jax.random.split(key)

    # Small batch of 1-D collocation points (reshape(-1, 1) semantics).
    N = 2048
    x = jax.random.uniform(k_x, (N, 1), jnp.float32, 0.0, 1.0)
    w1, b1, w2, b2 = init_params(k_p)

    # tn=512 keeps the demo tile small while giving a 4-step parallel grid
    # (>=2 steps so both v7x TensorCores get work); production default is
    # tn=16384 to amortize per-step overhead on large collocation batches.
    y = mlp_forward(x, w1, b1, w2, b2, tn=512)
    y = jax.block_until_ready(y)

    y_ref = mlp_reference(x, w1, b1, w2, b2)
    assert y.shape == (N, 2)
    assert jnp.allclose(y, y_ref, atol=1e-4, rtol=1e-4), "mismatch vs reference"

    print("KERNEL_OK")
</pallas_src>

<mosaic_0001>
module attributes {stable_mosaic.version = 11 : i64} {
  func.func @mlp_kernel(%arg0: i32, %arg1: memref<1x512xf32, #tpu.memory_space<vmem>>, %arg2: memref<20x1xf32, #tpu.memory_space<vmem>>, %arg3: memref<20x1xf32, #tpu.memory_space<vmem>>, %arg4: memref<20x2xf32, #tpu.memory_space<vmem>>, %arg5: memref<2x1xf32, #tpu.memory_space<vmem>>, %arg6: memref<2x512xf32, #tpu.memory_space<vmem>>) attributes {dimension_semantics = [#tpu.dimension_semantics<parallel>], iteration_bounds = array<i64: 4>, scalar_prefetch = 0 : i64, scratch_operands = 0 : i64, tpu.core_type = #tpu.core_type<tc>, window_params = [{transform_indices = @transform_0, window_bounds = array<i64: 1, 512>}, {pipeline_mode = #tpu.pipeline_mode<synchronous>, transform_indices = @transform_1, window_bounds = array<i64: 20, 1>}, {pipeline_mode = #tpu.pipeline_mode<synchronous>, transform_indices = @transform_2, window_bounds = array<i64: 20, 1>}, {pipeline_mode = #tpu.pipeline_mode<synchronous>, transform_indices = @transform_3, window_bounds = array<i64: 20, 2>}, {pipeline_mode = #tpu.pipeline_mode<synchronous>, transform_indices = @transform_4, window_bounds = array<i64: 2, 1>}, {transform_indices = @transform_5, window_bounds = array<i64: 2, 512>}]} {
    %c0 = arith.constant 0 : index
    %c0_0 = arith.constant 0 : index
    %0 = vector.load %arg1[%c0, %c0_0] : memref<1x512xf32, #tpu.memory_space<vmem>>, vector<1x512xf32>
    %c0_1 = arith.constant 0 : index
    %c0_2 = arith.constant 0 : index
    %1 = vector.load %arg2[%c0_1, %c0_2] : memref<20x1xf32, #tpu.memory_space<vmem>>, vector<20x1xf32>
    %c0_3 = arith.constant 0 : index
    %c0_4 = arith.constant 0 : index
    %2 = vector.load %arg3[%c0_3, %c0_4] : memref<20x1xf32, #tpu.memory_space<vmem>>, vector<20x1xf32>
    %3 = vector.broadcast %1 : vector<20x1xf32> to vector<20x512xf32>
    %4 = vector.broadcast %0 : vector<1x512xf32> to vector<20x512xf32>
    %5 = arith.mulf %3, %4 : vector<20x512xf32>
    %6 = vector.broadcast %2 : vector<20x1xf32> to vector<20x512xf32>
    %7 = arith.addf %5, %6 : vector<20x512xf32>
    %8 = math.tanh %7 : vector<20x512xf32>
    %c0_5 = arith.constant 0 : index
    %c0_6 = arith.constant 0 : index
    %9 = vector.load %arg4[%c0_5, %c0_6] : memref<20x2xf32, #tpu.memory_space<vmem>>, vector<20x2xf32>
    %10 = vector.extract_strided_slice %9 {offsets = [0, 0], sizes = [20, 1], strides = [1, 1]} : vector<20x2xf32> to vector<20x1xf32>
    %11 = vector.broadcast %10 : vector<20x1xf32> to vector<20x512xf32>
    %12 = arith.mulf %8, %11 : vector<20x512xf32>
    %cst = arith.constant dense<0.000000e+00> : vector<512xf32>
    %13 = vector.multi_reduction <add>, %12, %cst [0] : vector<20x512xf32> to vector<512xf32>
    %14 = vector.shape_cast %13 : vector<512xf32> to vector<1x512xf32>
    %15 = vector.extract_strided_slice %9 {offsets = [0, 1], sizes = [20, 1], strides = [1, 1]} : vector<20x2xf32> to vector<20x1xf32>
    %16 = vector.broadcast %15 : vector<20x1xf32> to vector<20x512xf32>
    %17 = arith.mulf %8, %16 : vector<20x512xf32>
    %cst_7 = arith.constant dense<0.000000e+00> : vector<512xf32>
    %18 = vector.multi_reduction <add>, %17, %cst_7 [0] : vector<20x512xf32> to vector<512xf32>
    %19 = vector.shape_cast %18 : vector<512xf32> to vector<1x512xf32>
    %20 = tpu.concatenate %14, %19 in 0 : vector<1x512xf32>, vector<1x512xf32> -> vector<2x512xf32>
    %c0_8 = arith.constant 0 : index
    %c0_9 = arith.constant 0 : index
    %21 = vector.load %arg5[%c0_8, %c0_9] : memref<2x1xf32, #tpu.memory_space<vmem>>, vector<2x1xf32>
    %22 = vector.broadcast %21 : vector<2x1xf32> to vector<2x512xf32>
    %23 = arith.addf %20, %22 : vector<2x512xf32>
    %c0_10 = arith.constant 0 : index
    %c0_11 = arith.constant 0 : index
    %24 = vector.load %arg6[%c0_10, %c0_11] : memref<2x512xf32, #tpu.memory_space<vmem>>, vector<2x512xf32>
    tpu.vector_store %arg6[%c0_10, %c0_11], %23 {strides = array<i32>} : memref<2x512xf32, #tpu.memory_space<vmem>>, vector<2x512xf32>,
    return
  }
  func.func @transform_0(%arg0: i32) -> (i32, i32) {
    %c0_i32 = arith.constant 0 : i32
    %c0_i32_0 = arith.constant 0 : i32
    return %c0_i32, %arg0 : i32, i32
  }
  func.func @transform_1(%arg0: i32) -> (i32, i32) {
    %c0_i32 = arith.constant 0 : i32
    %c0_i32_0 = arith.constant 0 : i32
    %c0_i32_1 = arith.constant 0 : i32
    return %c0_i32, %c0_i32_0 : i32, i32
  }
  func.func @transform_2(%arg0: i32) -> (i32, i32) {
    %c0_i32 = arith.constant 0 : i32
    %c0_i32_0 = arith.constant 0 : i32
    %c0_i32_1 = arith.constant 0 : i32
    return %c0_i32, %c0_i32_0 : i32, i32
  }
  func.func @transform_3(%arg0: i32) -> (i32, i32) {
    %c0_i32 = arith.constant 0 : i32
    %c0_i32_0 = arith.constant 0 : i32
    %c0_i32_1 = arith.constant 0 : i32
    return %c0_i32, %c0_i32_0 : i32, i32
  }
  func.func @transform_4(%arg0: i32) -> (i32, i32) {
    %c0_i32 = arith.constant 0 : i32
    %c0_i32_0 = arith.constant 0 : i32
    %c0_i32_1 = arith.constant 0 : i32
    return %c0_i32, %c0_i32_0 : i32, i32
  }
  func.func @transform_5(%arg0: i32) -> (i32, i32) {
    %c0_i32 = arith.constant 0 : i32
    %c0_i32_0 = arith.constant 0 : i32
    return %c0_i32, %arg0 : i32, i32
  }
}

</mosaic_0001>

<llo_original>
// kernel: mlp_forward.1
$region0: #{mlp_forward.1}
  #allocation0 [shape = 'u32[]', space=smem, size = 0x4, offset = 0x4, fixed_abs, tag = 'smem constant byte address 0x4 - core index']
  #allocation1 [shape = 'u32[144,128]{1,0:T(1,128)}', space=vmem, size = 0x12000, scoped, tag = 'internal scratch']
  %s0 = inlined_call_operand.vmem [shape: f32[1,2048], index: 0, kind: input, shape index: {}]
  %s1 = inlined_call_operand.vmem [shape: f32[20,1], index: 1, kind: input, shape index: {}]
  %s2 = inlined_call_operand.vmem [shape: f32[20,1], index: 2, kind: input, shape index: {}]
  %s3 = inlined_call_operand.vmem [shape: f32[20,2], index: 3, kind: input, shape index: {}]
  %s4 = inlined_call_operand.vmem [shape: f32[2,1], index: 4, kind: input, shape index: {}]
  %s5 = inlined_call_operand.hbm [shape: f32[2,2048], index: 5, kind: output, shape index: {}]
  %s6 = sld [smem:[#allocation0]]
  $region53: #{mlp_forward.1} parent=0
    _
  %s8 = ssub.s32 1, %s6
  %s9 = scalar_select 0, %s8, %s6
  $region1: #{mlp_forward.1} parent=0
    #allocation2 [shape = 'u8[8192]{0}', space=vmem, size = 0x2000, scoped, tag = 'output window, operand 0']
    #allocation3 [shape = 's32[2]{0}', space=sflag, size = 0x8, scoped, tag = 'scoped memory for mlp_forward.1']
    %10 = vsyncpa [#allocation3], 0
    %s11 = scalar_lea.sflag [#allocation3], 1
    %12 = vsyncpa %s11, 0
    loop: start=0, step=1, limit=6
    $region2: #{mlp_forward.1} parent=1 // loop_pre_header
      _
    $region3: #{mlp_forward.1} parent=1 // loop_header
      %s14 = sphi 0, %s18
      %p15 = scmp.ge.s32.totalorder %s14, 6
      %s24 = sphi 0, %s26
      %s27 = sphi 0, %s24
      %s28 = sphi 0, %s27
      %s44 = sphi 0, %s28
      %s48 = sphi 0, %s48
      %s50 = sphi 0, %s48
      %s51 = sphi 0, %s50
      %s65 = sphi 0, %s51
      %s69 = sphi 0, %s69
      %s71 = sphi 0, %s69
      %s72 = sphi 0, %s71
      %s86 = sphi 0, %s72
      %s90 = sphi 0, %s90
      %s92 = sphi 0, %s90
      %s93 = sphi 0, %s92
      %s107 = sphi 0, %s93
      %s111 = sphi 0, %s111
      %s113 = sphi 0, %s111
      %s114 = sphi 0, %s113
      %s128 = sphi 0, %s114
      %s134 = sphi 0, %s136
      %s137 = sphi 0, %s134
      %s138 = sphi 0, %s137
      %s154 = sphi 0, %s138
    $region4: #{mlp_forward.1} parent=1 // loop_header_branch
      %17 = sbr.rel (%p15) target = $region8
    $region5: #{mlp_forward.1} parent=1 // loop_body
      %s19 = ssub.s32 %s14, 1
      %s20 = ssub.s32 %s14, 2
      %s21 = sadd.s32 %s14, 1
      %s22 = ssub.s32 %s14, %s21
      %p23 = scmp.eq.s32.totalorder %s22, 0
      %s25 = sadd.s32 %s24, 1
      %s26 = scalar_select %p23, %s24, %s25
      %p29 = pneg %p23
      %p30 = scmp.eq.s32.totalorder %s14, 3
      %p31 = por %p29, %p30
      %p32 = scmp.ne.s32.totalorder %s24, %s27
      %p33 = scmp.eq.s32.totalorder %s14, 0
      %p34 = por %p32, %p33
      %p35 = scmp.ne.s32.totalorder %s24, %s27
      %p36 = scmp.eq.s32.totalorder %s19, 3
      %p37 = por %p35, %p36
      %p38 = scmp.ne.s32.totalorder %s27, %s28
      %p39 = scmp.eq.s32.totalorder %s19, 0
      %p40 = por %p38, %p39
      %p41 = scmp.ne.s32.totalorder %s27, %s28
      %p42 = scmp.eq.s32.totalorder %s20, 3
      %p43 = por %p41, %p42
      %p45 = scmp.ne.s32.totalorder %s28, %s44
      %p46 = scmp.eq.s32.totalorder %s20, 0
      %p47 = por %p45, %p46
      %s49 = sadd.s32 %s48, 1
      %p52 = scmp.eq.s32.totalorder %s14, 3
      %p53 = scmp.ne.s32.totalorder %s48, %s50
      %p54 = scmp.eq.s32.totalorder %s14, 0
      %p55 = por %p53, %p54
      %p56 = scmp.ne.s32.totalorder %s48, %s50
      %p57 = scmp.eq.s32.totalorder %s19, 3
      %p58 = por %p56, %p57
      %p59 = scmp.ne.s32.totalorder %s50, %s51
      %p60 = scmp.eq.s32.totalorder %s19, 0
      %p61 = por %p59, %p60
      %p62 = scmp.ne.s32.totalorder %s50, %s51
      %p63 = scmp.eq.s32.totalorder %s20, 3
      %p64 = por %p62, %p63
      %p66 = scmp.ne.s32.totalorder %s51, %s65
      %p67 = scmp.eq.s32.totalorder %s20, 0
      %p68 = por %p66, %p67
      %s70 = sadd.s32 %s69, 1
      %p73 = scmp.eq.s32.totalorder %s14, 3
      %p74 = scmp.ne.s32.totalorder %s69, %s71
      %p75 = scmp.eq.s32.totalorder %s14, 0
      %p76 = por %p74, %p75
      %p77 = scmp.ne.s32.totalorder %s69, %s71
      %p78 = scmp.eq.s32.totalorder %s19, 3
      %p79 = por %p77, %p78
      %p80 = scmp.ne.s32.totalorder %s71, %s72
      %p81 = scmp.eq.s32.totalorder %s19, 0
      %p82 = por %p80, %p81
      %p83 = scmp.ne.s32.totalorder %s71, %s72
      %p84 = scmp.eq.s32.totalorder %s20, 3
      %p85 = por %p83, %p84
      %p87 = scmp.ne.s32.totalorder %s72, %s86
      %p88 = scmp.eq.s32.totalorder %s20, 0
      %p89 = por %p87, %p88
      %s91 = sadd.s32 %s90, 1
      %p94 = scmp.eq.s32.totalorder %s14, 3
      %p95 = scmp.ne.s32.totalorder %s90, %s92
      %p96 = scmp.eq.s32.totalorder %s14, 0
      %p97 = por %p95, %p96
      %p98 = scmp.ne.s32.totalorder %s90, %s92
      %p99 = scmp.eq.s32.totalorder %s19, 3
      %p100 = por %p98, %p99
      %p101 = scmp.ne.s32.totalorder %s92, %s93
      %p102 = scmp.eq.s32.totalorder %s19, 0
      %p103 = por %p101, %p102
      %p104 = scmp.ne.s32.totalorder %s92, %s93
      %p105 = scmp.eq.s32.totalorder %s20, 3
      %p106 = por %p104, %p105
      %p108 = scmp.ne.s32.totalorder %s93, %s107
      %p109 = scmp.eq.s32.totalorder %s20, 0
      %p110 = por %p108, %p109
      %s112 = sadd.s32 %s111, 1
      %p115 = scmp.eq.s32.totalorder %s14, 3
      %p116 = scmp.ne.s32.totalorder %s111, %s113
      %p117 = scmp.eq.s32.totalorder %s14, 0
      %p118 = por %p116, %p117
      %p119 = scmp.ne.s32.totalorder %s111, %s113
      %p120 = scmp.eq.s32.totalorder %s19, 3
      %p121 = por %p119, %p120
      %p122 = scmp.ne.s32.totalorder %s113, %s114
      %p123 = scmp.eq.s32.totalorder %s19, 0
      %p124 = por %p122, %p123
      %p125 = scmp.ne.s32.totalorder %s113, %s114
      %p126 = scmp.eq.s32.totalorder %s20, 3
      %p127 = por %p125, %p126
      %p129 = scmp.ne.s32.totalorder %s114, %s128
      %p130 = scmp.eq.s32.totalorder %s20, 0
      %p131 = por %p129, %p130
      %s132 = ssub.s32 %s14, %s21
      %p133 = scmp.eq.s32.totalorder %s132, 0
      %s135 = sadd.s32 %s134, 1
      %s136 = scalar_select %p133, %s134, %s135
      %p139 = pneg %p133
      %p140 = scmp.eq.s32.totalorder %s14, 3
      %p141 = por %p139, %p140
      %p142 = scmp.ne.s32.totalorder %s134, %s137
      %p143 = scmp.eq.s32.totalorder %s14, 0
      %p144 = por %p142, %p143
      %p145 = scmp.ne.s32.totalorder %s134, %s137
      %p146 = scmp.eq.s32.totalorder %s19, 3
      %p147 = por %p145, %p146
      %p148 = scmp.ne.s32.totalorder %s137, %s138
      %p149 = scmp.eq.s32.totalorder %s19, 0
      %p150 = por %p148, %p149
      %p151 = scmp.ne.s32.totalorder %s137, %s138
      %p152 = scmp.eq.s32.totalorder %s20, 3
      %p153 = por %p151, %p152
      %p155 = scmp.ne.s32.totalorder %s138, %s154
      %p156 = scmp.eq.s32.totalorder %s20, 0
      %p157 = por %p155, %p156
      %p158 = scmp.le.s32.totalorder 1, %s14
      %p159 = scmp.lt.s32.totalorder %s14, 5
      %p160 = pnand %p158, %p159
      %p161 = pneg %p160
      // Predicated region
      $region9: #{mlp_forward.1} parent=5 // pred_check
        _
      $region10: #{mlp_forward.1} parent=5 // pred_check_branch
        %163 = sbr.rel (%p160) target = $region12
      $region11: #{mlp_forward.1} parent=5 // pred_region
        %s164 = ssub.s32 %s14, 1
        // Predicated region
        $region13: #{mlp_forward.1} parent=11 // pred_check
          %p165 = pneg %p61
        $region14: #{mlp_forward.1} parent=11 // pred_check_branch
          %167 = sbr.rel (%p165) target = $region16
        $region15: #{mlp_forward.1} parent=11 // pred_region
          _
        $region16: #{mlp_forward.1} parent=11 // pred_fallthru
          _
        // Predicated region
        $region17: #{mlp_forward.1} parent=11 // pred_check
          %p168 = pneg %p82
        $region18: #{mlp_forward.1} parent=11 // pred_check_branch
          %170 = sbr.rel (%p168) target = $region20
        $region19: #{mlp_forward.1} parent=11 // pred_region
          _
        $region20: #{mlp_forward.1} parent=11 // pred_fallthru
          _
        // Predicated region
        $region21: #{mlp_forward.1} parent=11 // pred_check
          %p171 = pneg %p103
        $region22: #{mlp_forward.1} parent=11 // pred_check_branch
          %173 = sbr.rel (%p171) target = $region24
        $region23: #{mlp_forward.1} parent=11 // pred_region
          _
        $region24: #{mlp_forward.1} parent=11 // pred_fallthru
          _
        // Predicated region
        $region25: #{mlp_forward.1} parent=11 // pred_check
          %p174 = pneg %p124
        $region26: #{mlp_forward.1} parent=11 // pred_check_branch
          %176 = sbr.rel (%p174) target = $region28
        $region27: #{mlp_forward.1} parent=11 // pred_region
          _
        $region28: #{mlp_forward.1} parent=11 // pred_fallthru
          _
      $region12: #{mlp_forward.1} parent=5 // pred_fallthru
        _
      %p177 = scmp.lt.s32.totalorder %s14, 4
      // Predicated region
      $region29: #{mlp_forward.1} parent=5 // pred_check
        %p178 = pneg %p177
      $region30: #{mlp_forward.1} parent=5 // pred_check_branch
        %180 = sbr.rel (%p178) target = $region32
      $region31: #{mlp_forward.1} parent=5 // pred_region
        // Predicated region
        $region33: #{mlp_forward.1} parent=31 // pred_check
          %p181 = pneg %p34
        $region34: #{mlp_forward.1} parent=31 // pred_check_branch
          %183 = sbr.rel (%p181) target = $region36
        $region35: #{mlp_forward.1} parent=31 // pred_region
          %s184 = smul.u32 4, %s14
          %p185 = scmp.lt.s32.totalorder %s184, 15
          %s186 = scalar_select %p185, %s184, 15
          %s187 = scalar_lea.vmem %s0, %s186
          %s188 = smul.u32 4, %s14
        $region36: #{mlp_forward.1} parent=31 // pred_fallthru
          _
      $region32: #{mlp_forward.1} parent=5 // pred_fallthru
        _
      %p189 = scmp.le.s32.totalorder 1, %s14
      %p190 = scmp.lt.s32.totalorder %s14, 5
      %p191 = pnand %p189, %p190
      %p192 = pneg %p191
      // Predicated region
      $region37: #{mlp_forward.1} parent=5 // pred_check
        _
      $region38: #{mlp_forward.1} parent=5 // pred_check_branch
        %194 = sbr.rel (%p191) target = $region40
      $region39: #{mlp_forward.1} parent=5 // pred_region
        %s195 = ssub.s32 %s14, 1
        %s196 = smul.u32 4, %s19
        %p197 = scmp.lt.s32.totalorder %s196, 15
        %s198 = scalar_select %p197, %s196, 15
        %s199 = scalar_lea.vmem %s0, %s198
        %p200 = pneg %p40
        %p201 = pneg %p37
        %p202 = pneg %p61
        %p203 = pneg %p58
        %p204 = pneg %p82
        %p205 = pneg %p79
        %p206 = pneg %p103
        %p207 = pneg %p100
        %p208 = pneg %p124
        %p209 = pneg %p121
        %p210 = pneg %p150
        %p211 = pneg %p147
        %s212 = sand.u32 %s137, 1
        %s213 = scalar_lea.sflag [#allocation3], %s212
        %s214 = sand.u32 %s137, 1
        %s215 = smul.addr %s214, 8
        %s216 = scalar_lea.vmem [#allocation2], %s215
        %s217 = smul.u32 4, %s19
        %p218 = scmp.lt.s32.totalorder %s217, 15
        %s219 = scalar_select %p218, %s217, 15
        %s220 = scalar_lea.vmem %s0, %s219
        %s221 = smul.u32 4, %s19
        %s222 = smul.u32 4, %s19
        %v223 = vld [vmem:[%s220] sm:$0xf]
        %v224 = vld [vmem:[%s1] sm:$0xff]
        %v225 = vld [vmem:[%s1 + $0x8] sm:$0xff]
        %v226 = vld [vmem:[%s1 + $0x10] sm:$0xf]
        %v227 = vld [vmem:[%s2] sm:$0xff]
        %v228 = vld [vmem:[%s2 + $0x8] sm:$0xff]
        %v229 = vld [vmem:[%s2 + $0x10] sm:$0xf]
        %231 = vset.pattern.permute.xlu0 0
        %232 = vperm.xlu0 %231, %v224
        %v233 = vpop.permute.xlu0 %232
        %236 = vset.pattern.permute.xlu0 0
        %237 = vperm.xlu0 %236, %v225
        %v238 = vpop.permute.xlu0 %237
        %241 = vset.pattern.permute.xlu0 0
        %242 = vperm.xlu0 %241, %v226
        %v243 = vpop.permute.xlu0 %242
        %v246 = vlaneseq
        %v247 = vshrl.u32 %v246, 7
        %v248 = vsub.s32 0, %v247
        %v249 = vrot.slane %v223, %v248
        %v250 = vlaneseq
        %v251 = vshrl.u32 %v250, 7
        %v252 = vsub.s32 1, %v251
        %v253 = vrot.slane %v223, %v252
        %v254 = vlaneseq
        %v255 = vshrl.u32 %v254, 7
        %v256 = vsub.s32 2, %v255
        %v257 = vrot.slane %v223, %v256
        %v258 = vlaneseq
        %v259 = vshrl.u32 %v258, 7
        %v260 = vsub.s32 3, %v259
        %v261 = vrot.slane %v223, %v260
        %v266 = vmul.f32 %v233, %v249
        %v267 = vmul.f32 %v233, %v253
        %v268 = vmul.f32 %v233, %v257
        %v269 = vmul.f32 %v233, %v261
        %v270 = vmul.f32 %v238, %v249
        %v271 = vmul.f32 %v238, %v253
        %v272 = vmul.f32 %v238, %v257
        %v273 = vmul.f32 %v238, %v261
        %v274 = vmul.f32 %v243, %v249
        %v275 = vmul.f32 %v243, %v253
        %v276 = vmul.f32 %v243, %v257
        %v277 = vmul.f32 %v243, %v261
        %279 = vset.pattern.permute.xlu0 0
        %280 = vperm.xlu0 %279, %v227
        %v281 = vpop.permute.xlu0 %280
        %284 = vset.pattern.permute.xlu0 0
        %285 = vperm.xlu0 %284, %v228
        %v286 = vpop.permute.xlu0 %285
        %289 = vset.pattern.permute.xlu0 0
        %290 = vperm.xlu0 %289, %v229
        %v291 = vpop.permute.xlu0 %290
        %v293 = vadd.f32 %v266, %v281
        %v294 = vadd.f32 %v267, %v281
        %v295 = vadd.f32 %v268, %v281
        %v296 = vadd.f32 %v269, %v281
        %v297 = vadd.f32 %v270, %v286
        %v298 = vadd.f32 %v271, %v286
        %v299 = vadd.f32 %v272, %v286
        %v300 = vadd.f32 %v273, %v286
        %v301 = vadd.f32 %v274, %v291
        %v302 = vadd.f32 %v275, %v291
        %v303 = vadd.f32 %v276, %v291
        %v304 = vadd.f32 %v277, %v291
        %v305 = vtanh.pop %v293
        %v306 = vtanh.pop %v294
        %v307 = vtanh.pop %v295
        %v308 = vtanh.pop %v296
        %v309 = vtanh.pop %v297
        %v310 = vtanh.pop %v298
        %v311 = vtanh.pop %v299
        %v312 = vtanh.pop %v300
        %v313 = vtanh.pop %v301
        %v314 = vtanh.pop %v302
        %v315 = vtanh.pop %v303
        %v316 = vtanh.pop %v304
        %v317 = vld [vmem:[%s3] sm:$0xff]
        %v318 = vld [vmem:[%s3 + $0x8] sm:$0xff]
        %v319 = vld [vmem:[%s3 + $0x10] sm:$0xf]
        %321 = vset.pattern.permute.xlu0 0
        %322 = vperm.xlu0 %321, %v317
        %v323 = vpop.permute.xlu0 %322
        %326 = vset.pattern.permute.xlu0 0
        %327 = vperm.xlu0 %326, %v318
        %v328 = vpop.permute.xlu0 %327
        %331 = vset.pattern.permute.xlu0 0
        %332 = vperm.xlu0 %331, %v319
        %v333 = vpop.permute.xlu0 %332
        %v335 = vmul.f32 %v305, %v323
        %v336 = vmul.f32 %v306, %v323
        %v337 = vmul.f32 %v307, %v323
        %v338 = vmul.f32 %v308, %v323
        %v339 = vmul.f32 %v309, %v328
        %v340 = vmul.f32 %v310, %v328
        %v341 = vmul.f32 %v311, %v328
        %v342 = vmul.f32 %v312, %v328
        %v343 = vmul.f32 %v313, %v333
        %v344 = vmul.f32 %v314, %v333
        %v345 = vmul.f32 %v315, %v333
        %v346 = vmul.f32 %v316, %v333
        %v347 = vadd.f32 %v335, %v339
        %vm348 = vcmask 1043456
        %v349 = vsel %vm348, %v343, 0.0
        %v350 = vadd.f32 %v347, %v349
        %v351 = vrot.slane %v350, 4
        %v352 = vadd.f32 %v350, %v351
        %v353 = vrot.slane %v352, 2
        %v354 = vadd.f32 %v352, %v353
        %v355 = vrot.slane %v354, 1
        %v356 = vadd.f32 %v354, %v355
        %v357 = vadd.f32 %v336, %v340
        %v358 = vsel %vm348, %v344, 0.0
        %v359 = vadd.f32 %v357, %v358
        %v360 = vrot.slane %v359, 4
        %v361 = vadd.f32 %v359, %v360
        %v362 = vrot.slane %v361, 2
        %v363 = vadd.f32 %v361, %v362
        %v364 = vrot.slane %v363, 1
        %v365 = vadd.f32 %v363, %v364
        %v366 = vadd.f32 %v337, %v341
        %v367 = vsel %vm348, %v345, 0.0
        %v368 = vadd.f32 %v366, %v367
        %v369 = vrot.slane %v368, 4
        %v370 = vadd.f32 %v368, %v369
        %v371 = vrot.slane %v370, 2
        %v372 = vadd.f32 %v370, %v371
        %v373 = vrot.slane %v372, 1
        %v374 = vadd.f32 %v372, %v373
        %v375 = vadd.f32 %v338, %v342
        %v376 = vsel %vm348, %v346, 0.0
        %v377 = vadd.f32 %v375, %v376
        %v378 = vrot.slane %v377, 4
        %v379 = vadd.f32 %v377, %v378
        %v380 = vrot.slane %v379, 2
        %v381 = vadd.f32 %v379, %v380
        %v382 = vrot.slane %v381, 1
        %v383 = vadd.f32 %v381, %v382
        %384 = vset.pattern.permute.xlu0 1
        %385 = vperm.xlu0 %384, %v317
        %v386 = vpop.permute.xlu0 %385
        %388 = vset.pattern.permute.xlu0 1
        %389 = vperm.xlu0 %388, %v318
        %v390 = vpop.permute.xlu0 %389
        %392 = vset.pattern.permute.xlu0 1
        %393 = vperm.xlu0 %392, %v319
        %v394 = vpop.permute.xlu0 %393
        %v396 = vmul.f32 %v305, %v386
        %v397 = vmul.f32 %v306, %v386
        %v398 = vmul.f32 %v307, %v386
        %v399 = vmul.f32 %v308, %v386
        %v400 = vmul.f32 %v309, %v390
        %v401 = vmul.f32 %v310, %v390
        %v402 = vmul.f32 %v311, %v390
        %v403 = vmul.f32 %v312, %v390
        %v404 = vmul.f32 %v313, %v394
        %v405 = vmul.f32 %v314, %v394
        %v406 = vmul.f32 %v315, %v394
        %v407 = vmul.f32 %v316, %v394
        %v408 = vadd.f32 %v396, %v400
        %v409 = vsel %vm348, %v404, 0.0
        %v410 = vadd.f32 %v408, %v409
        %v411 = vrot.slane %v410, 4
        %v412 = vadd.f32 %v410, %v411
        %v413 = vrot.slane %v412, 2
        %v414 = vadd.f32 %v412, %v413
        %v415 = vrot.slane %v414, 1
        %v416 = vadd.f32 %v414, %v415
        %v417 = vadd.f32 %v397, %v401
        %v418 = vsel %vm348, %v405, 0.0
        %v419 = vadd.f32 %v417, %v418
        %v420 = vrot.slane %v419, 4
        %v421 = vadd.f32 %v419, %v420
        %v422 = vrot.slane %v421, 2
        %v423 = vadd.f32 %v421, %v422
        %v424 = vrot.slane %v423, 1
        %v425 = vadd.f32 %v423, %v424
        %v426 = vadd.f32 %v398, %v402
        %v427 = vsel %vm348, %v406, 0.0
        %v428 = vadd.f32 %v426, %v427
        %v429 = vrot.slane %v428, 4
        %v430 = vadd.f32 %v428, %v429
        %v431 = vrot.slane %v430, 2
        %v432 = vadd.f32 %v430, %v431
        %v433 = vrot.slane %v432, 1
        %v434 = vadd.f32 %v432, %v433
        %v435 = vadd.f32 %v399, %v403
        %v436 = vsel %vm348, %v407, 0.0
        %v437 = vadd.f32 %v435, %v436
        %v438 = vrot.slane %v437, 4
        %v439 = vadd.f32 %v437, %v438
        %v440 = vrot.slane %v439, 2
        %v441 = vadd.f32 %v439, %v440
        %v442 = vrot.slane %v441, 1
        %v443 = vadd.f32 %v441, %v442
        %vm444 = vcmask 1040384
        %v445 = vsel %vm444, %v356, %v416
        %v446 = vsel %vm444, %v365, %v425
        %v447 = vsel %vm444, %v374, %v434
        %v448 = vsel %vm444, %v383, %v443
        %v449 = vld [vmem:[%s4] sm:$0x3]
        %451 = vset.pattern.permute.xlu0 0
        %452 = vperm.xlu0 %451, %v449
        %v453 = vpop.permute.xlu0 %452
        %v455 = vadd.f32 %v445, %v453
        %v456 = vadd.f32 %v446, %v453
        %v457 = vadd.f32 %v447, %v453
        %v458 = vadd.f32 %v448, %v453
        %v463 = vcombine.low %v455, %v456
        %v464 = vcombine.low %v457, %v458
        %v466 = vunpack.c.l.s4 1983009808
        %v467 = vunpack.c.0.s8 %v466
        %v468 = vlaneseq
        %v469 = vshrl.u32 %v468, 7
        %v470 = vsub.s32 %v467, %v469
        %v471 = vrot.slane %v463, %v470
        %v473 = vunpack.c.l.s4 1983009808
        %v474 = vunpack.c.0.s8 %v473
        %v475 = vlaneseq
        %v476 = vshrl.u32 %v475, 7
        %v477 = vsub.s32 %v474, %v476
        %v478 = vrot.slane %v464, %v477
        %v479 = vcombine.low %v471, %v478
        %481 = vst [vmem:[%s216] sm:$0xff] %v479
        %s482 = sand.u32 %s137, 1
        %s483 = scalar_lea.sflag [#allocation3], %s482
        %s484 = sand.u32 %s137, 1
        %s485 = smul.addr %s484, 8
        %s486 = scalar_lea.vmem [#allocation2], %s485
        // Predicated region
        $region41: #{mlp_forward.1} parent=39 // pred_check
          %p487 = pneg %p147
        $region42: #{mlp_forward.1} parent=39 // pred_check_branch
          %489 = sbr.rel (%p487) target = $region44
        $region43: #{mlp_forward.1} parent=39 // pred_region
          %s490 = smul.u32 4, %s19
          %s492 = ssub.s32 128, 128
          %493 = vsyncadd %s483, %s492
          %s494 = smul.addr %s490, 32
          %s495 = scalar_lea.hbm %s5, %s494
          %s497 = sshll.u32 %s486, 4
          %s498 = int_to_ptr.vmem [resolvable:$true] %s497
          %500 = dma.vmem_to_hbm [thread:$0]  %s498, 128, %s495, %s483
        $region44: #{mlp_forward.1} parent=39 // pred_fallthru
          _
      $region40: #{mlp_forward.1} parent=5 // pred_fallthru
        _
      %p501 = scmp.le.s32.totalorder 2, %s14
      // Predicated region
      $region45: #{mlp_forward.1} parent=5 // pred_check
        %p502 = pneg %p501
      $region46: #{mlp_forward.1} parent=5 // pred_check_branch
        %504 = sbr.rel (%p502) target = $region48
      $region47: #{mlp_forward.1} parent=5 // pred_region
        %s505 = ssub.s32 %s14, 2
        // Predicated region
        $region49: #{mlp_forward.1} parent=47 // pred_check
          %p506 = pneg %p153
        $region50: #{mlp_forward.1} parent=47 // pred_check_branch
          %508 = sbr.rel (%p506) target = $region52
        $region51: #{mlp_forward.1} parent=47 // pred_region
          %s509 = sand.u32 %s138, 1
          %s510 = scalar_lea.sflag [#allocation3], %s509
          %s511 = sand.u32 %s138, 1
          %s512 = smul.addr %s511, 8
          %s513 = scalar_lea.vmem [#allocation2], %s512
          %514 = dma.done %s510, 128
        $region52: #{mlp_forward.1} parent=47 // pred_fallthru
          _
      $region48: #{mlp_forward.1} parent=5 // pred_fallthru
        _
    $region6: #{mlp_forward.1} parent=1 // loop_footer
      %s18 = sadd.s32 1, %s14
    $region7: #{mlp_forward.1} parent=1 // loop_footer_branch
      %13 = sbr.rel target = $region3
    $region8: #{mlp_forward.1} parent=1 // loop_exit
      _
    %515 = vsyncpa [#allocation3], 1
    %s516 = scalar_lea.sflag [#allocation3], 1
    %517 = vsyncpa %s516, 1

</llo_original>
